<compile_context>
chip_gen: v6e
topology: v6e:2x2x1
jax: 0.10.0
libtpu: 0.0.40
codegen_flags: <defaults>
</compile_context>

<pallas_src>
import functools

import jax
import jax.numpy as jnp
from jax.experimental import pallas as pl
from jax.experimental.pallas import tpu as pltpu


def _round_up(x: int, m: int) -> int:
    return (x + m - 1) // m * m


def _cdiv(a: int, b: int) -> int:
    return -(-a // b)


# ---------------------------------------------------------------------------
# Kernels
# ---------------------------------------------------------------------------

def _embed_kernel(x_ref, w_ref, b_ref, o_ref, *, compute_dtype):
    """One (TM, TN) output tile: full-K MXU matmul + bias, f32 accumulation."""
    acc = jnp.dot(
        x_ref[...].astype(compute_dtype),       # cast in-kernel (VPU), not in HBM
        w_ref[...].astype(compute_dtype),
        preferred_element_type=jnp.float32,
    )
    o_ref[...] = (acc + b_ref[...].astype(jnp.float32)).astype(o_ref.dtype)


def _embed_kernel_ksplit(x_ref, w_ref, b_ref, o_ref, acc_ref, *, compute_dtype):
    """(TM, TN) tile accumulated over the K-reduction grid axis (axis 2)."""
    k = pl.program_id(2)

    @pl.when(k == 0)
    def _():
        acc_ref[...] = jnp.zeros_like(acc_ref)

    acc_ref[...] += jnp.dot(
        x_ref[...].astype(compute_dtype),
        w_ref[...].astype(compute_dtype),
        preferred_element_type=jnp.float32,
    )

    @pl.when(k == pl.num_programs(2) - 1)
    def _():
        o_ref[...] = (acc_ref[...] + b_ref[...].astype(jnp.float32)).astype(o_ref.dtype)


# ---------------------------------------------------------------------------
# Tiling / budget selection
# ---------------------------------------------------------------------------

_TM_CANDS = (512, 384, 256, 192, 128, 96, 64, 32, 16, 8)
_TN_CANDS = (1024, 768, 512, 384, 256, 128)
_TK_CANDS = (4096, 2048, 1024, 512, 256, 128)


def _vmem_capacity_bytes() -> int:
    try:
        info = pltpu.get_tpu_info()
        cap = int(getattr(info, "vmem_capacity_bytes", 0))
        if cap > 0:
            return cap
    except Exception:
        pass
    return 64 << 20  # conservative default == v7x per-TensorCore VMEM


def _tm_candidates(B: int, tm_max: int):
    cap = max(8, int(tm_max))
    full = _round_up(B, 8)
    cands = []
    if full <= cap:
        cands.append(full)                       # single batch tile, zero waste
    cands += [t for t in _TM_CANDS if t <= cap and t < full and t not in cands]

    def waste_frac(t):
        return (_cdiv(B, t) * t - B) / max(B, 1)

    # Bound padded-row waste (wasted MXU work on awkward batch sizes).
    good = [t for t in cands if waste_frac(t) <= 0.30]
    return good if good else cands


def _select_tiling(B, K, dim, itemsizes, budget, tm_max, tn_max):
    """Returns (tm, tn, tk, ksplit)."""
    x_isz, w_isz, b_isz, o_isz = itemsizes

    def ws(tm_, tn_, tk_, acc):
        s = (2 * tm_ * tk_ * x_isz       # x block, double-buffered
             + 2 * tk_ * tn_ * w_isz     # W block, double-buffered
             + 2 * tn_ * b_isz           # bias block
             + 2 * tm_ * tn_ * o_isz)    # output block
        if acc:
            s += tm_ * tn_ * 4           # f32 accumulator scratch
        return s

    tm_good = _tm_candidates(B, tm_max)

    # Phase 1: W (+bias) fully VMEM-resident -> single dim tile, x streamed once.
    if dim <= tn_max:
        for tm in tm_good:
            if tm < min(128, tm_good[0]):
                break  # don't starve the MXU M-dim just to keep W resident
            if ws(tm, dim, K, False) <= budget:
                return tm, dim, K, False

    # Phase 2: 2-D tiling over (batch, dim); K kept whole per block.
    tn_cands = [t for t in _TN_CANDS if t <= min(tn_max, dim)]
    best = None
    for tm in tm_good:
        for tn in tn_cands:
            if ws(tm, tn, K, False) <= budget:
                score = (min(tm, tn), tm * tn)   # prefer balanced, large tiles
                if best is None or score > best[0]:
                    best = (score, tm, tn)
    if best is not None:
        return best[1], best[2], K, False

    # Phase 3: K too large -> add a K-reduction grid axis + f32 accumulator.
    tm3 = next((t for t in tm_good if t <= 256), tm_good[-1])
    if dim <= min(tn_max, 256):
        tn3 = dim
    elif min(tn_max, dim) >= 256:
        tn3 = 256
    else:
        tn3 = 128
    tk3 = next((tk for tk in _TK_CANDS if tk < K and ws(tm3, tn3, tk, True) <= budget), 128)
    return tm3, tn3, tk3, True


# ---------------------------------------------------------------------------
# Public entry point
# ---------------------------------------------------------------------------

def embed(x, w, b, *,
          out_dtype=None,
          use_bf16: bool = True,
          allow_fallback: bool = True,
          tm_max: int = 512,
          tn_max=None,
          vmem_budget_bytes=None):
    """y = x @ w + b.   x: [B, input_size], w: [input_size, dim], b: [dim]."""
    B, K = x.shape
    Kw, dim = w.shape
    assert K == Kw, (x.shape, w.shape)
    b = jnp.reshape(b, (1, dim))
    out_dtype = x.dtype if out_dtype is None else out_dtype
    compute_dtype = jnp.bfloat16 if use_bf16 else x.dtype

    # Tiny problems: pallas_call launch cost dominates; let XLA fuse it.
    if allow_fallback and (B * K * dim) < (1 << 20):
        y = jnp.dot(x.astype(compute_dtype), w.astype(compute_dtype),
                    preferred_element_type=jnp.float32)
        return (y + b.astype(jnp.float32)).astype(out_dtype)

    x_isz = jnp.dtype(x.dtype).itemsize
    w_isz = jnp.dtype(w.dtype).itemsize
    b_isz = jnp.dtype(b.dtype).itemsize
    o_isz = jnp.dtype(out_dtype).itemsize

    # Generation-aware budget: ~3/8 of physical VMEM, capped at 48 MiB
    # (v5e/v6e 128 MiB -> 48 MiB, v7x 64 MiB -> 24 MiB).
    vmem_cap = _vmem_capacity_bytes()
    if vmem_budget_bytes is not None:
        budget = int(vmem_budget_bytes)
    else:
        budget = min(48 << 20, max(16 << 20, (vmem_cap * 3) // 8))

    tn_max_eff = dim if tn_max is None else int(tn_max)
    tm, tn, tk, ksplit = _select_tiling(
        B, K, dim, (x_isz, w_isz, b_isz, o_isz), budget, tm_max, tn_max_eff)

    m_tiles = _cdiv(B, tm)
    n_tiles = _cdiv(dim, tn)

    kern = functools.partial(
        _embed_kernel_ksplit if ksplit else _embed_kernel,
        compute_dtype=compute_dtype)

    cost = pl.CostEstimate(
        flops=2 * B * K * dim,
        transcendentals=0,
        bytes_accessed=(B * K * x_isz + K * dim * w_isz + dim * b_isz
                        + B * dim * o_isz),
    )

    ws_bytes = (2 * tm * tk * x_isz + 2 * tk * tn * w_isz + 2 * tn * b_isz
                + 2 * tm * tn * o_isz + (tm * tn * 4 if ksplit else 0))
    # Scoped VMEM limit: enough headroom, but clamped below physical VMEM
    # (v7x has only 64 MiB per TensorCore).
    vmem_limit = int(min(max(ws_bytes * 5 // 4 + (2 << 20), 32 << 20),
                         max(32 << 20, vmem_cap - (16 << 20))))

    if not ksplit:
        if n_tiles == 1:
            grid = (m_tiles,)
            in_specs = [
                pl.BlockSpec((tm, K), lambda i: (i, 0)),
                pl.BlockSpec((K, tn), lambda i: (0, 0)),
                pl.BlockSpec((1, tn), lambda i: (0, 0)),
            ]
            out_specs = pl.BlockSpec((tm, tn), lambda i: (i, 0))
            sem = ("parallel",)
        elif m_tiles == 1:
            grid = (n_tiles,)
            in_specs = [
                pl.BlockSpec((tm, K), lambda j: (0, 0)),
                pl.BlockSpec((K, tn), lambda j: (0, j)),
                pl.BlockSpec((1, tn), lambda j: (0, j)),
            ]
            out_specs = pl.BlockSpec((tm, tn), lambda j: (0, j))
            sem = ("parallel",)
        else:
            # Pick grid order by restream traffic:
            #   dim-slow   restreams x  (B*K)   an extra (n_tiles-1) times
            #   batch-slow restreams W  (K*dim) an extra (m_tiles-1) times
            dim_slow_cost = B * K * x_isz * (n_tiles - 1)
            batch_slow_cost = K * dim * w_isz * (m_tiles - 1)
            if dim_slow_cost <= batch_slow_cost:
                grid = (n_tiles, m_tiles)
                in_specs = [
                    pl.BlockSpec((tm, K), lambda j, i: (i, 0)),
                    pl.BlockSpec((K, tn), lambda j, i: (0, j)),
                    pl.BlockSpec((1, tn), lambda j, i: (0, j)),
                ]
                out_specs = pl.BlockSpec((tm, tn), lambda j, i: (i, j))
            else:
                grid = (m_tiles, n_tiles)
                in_specs = [
                    pl.BlockSpec((tm, K), lambda i, j: (i, 0)),
                    pl.BlockSpec((K, tn), lambda i, j: (0, j)),
                    pl.BlockSpec((1, tn), lambda i, j: (0, j)),
                ]
                out_specs = pl.BlockSpec((tm, tn), lambda i, j: (i, j))
            sem = ("parallel", "parallel")

        return pl.pallas_call(
            kern,
            out_shape=jax.ShapeDtypeStruct((B, dim), out_dtype),
            grid=grid,
            in_specs=in_specs,
            out_specs=out_specs,
            compiler_params=pltpu.CompilerParams(
                dimension_semantics=sem, vmem_limit_bytes=vmem_limit),
            cost_estimate=cost,
        )(x, w, b)

    # ---- K-reduction path (very large input_size) -------------------------
    # Pad K to a tile multiple with zeros (zeros keep the reduction exact).
    # TODO(synk): an in-kernel K mask would avoid this extra pass over x/w when
    #             input_size is not already a multiple of tk (rare regime).
    k_pad = _round_up(K, tk)
    x_k = x if k_pad == K else jnp.pad(x, ((0, 0), (0, k_pad - K)))
    w_k = w if k_pad == K else jnp.pad(w, ((0, k_pad - K), (0, 0)))
    k_tiles = k_pad // tk

    return pl.pallas_call(
        kern,
        out_shape=jax.ShapeDtypeStruct((B, dim), out_dtype),
        grid=(m_tiles, n_tiles, k_tiles),
        in_specs=[
            pl.BlockSpec((tm, tk), lambda i, j, k: (i, k)),
            pl.BlockSpec((tk, tn), lambda i, j, k: (k, j)),
            pl.BlockSpec((1, tn), lambda i, j, k: (0, j)),
        ],
        out_specs=pl.BlockSpec((tm, tn), lambda i, j, k: (i, j)),
        scratch_shapes=[pltpu.VMEM((tm, tn), jnp.float32)],
        compiler_params=pltpu.CompilerParams(
            dimension_semantics=("parallel", "parallel", "arbitrary"),
            vmem_limit_bytes=vmem_limit),
        cost_estimate=cost,
    )(x_k, w_k, b)


# ---------------------------------------------------------------------------
# Self-test
# ---------------------------------------------------------------------------

if __name__ == "__main__":
    key = jax.random.PRNGKey(0)
    ks = jax.random.split(key, 12)

    def make(batch, input_size, dim, k1, k2, k3):
        x = jax.random.normal(k1, (batch, input_size), dtype=jnp.float32)
        w = jax.random.normal(k2, (input_size, dim), dtype=jnp.float32) * 0.05
        b = jax.random.normal(k3, (dim,), dtype=jnp.float32) * 0.01
        return x, w, b

    def check(y, x, w, b):
        y_ref = jnp.dot(x.astype(jnp.bfloat16), w.astype(jnp.bfloat16),
                        preferred_element_type=jnp.float32) + b[None, :]
        assert y.shape == y_ref.shape
        err = float(jnp.max(jnp.abs(y.astype(jnp.float32) - y_ref)))
        assert jnp.allclose(y.astype(jnp.float32), y_ref, atol=2e-2, rtol=2e-2), err

    # (a) tiny module-sized shape -> XLA fallback path.
    x, w, b = make(8, 32, 128, *ks[0:3])
    y = embed(x, w, b)
    jax.block_until_ready(y)
    check(y, x, w, b)

    # (b) Pallas path: W VMEM-resident, single dim tile, 1-D batch grid.
    x, w, b = make(200, 96, 320, *ks[3:6])
    y = embed(x, w, b, allow_fallback=False)
    jax.block_until_ready(y)
    check(y, x, w, b)

    # (c) Pallas path: 2-D grid with partial batch and dim boundary tiles
    #     (tile caps forced small so the multi-tile code path is exercised).
    x, w, b = make(200, 64, 320, *ks[6:9])
    y = embed(x, w, b, allow_fallback=False, tm_max=128, tn_max=128)
    jax.block_until_ready(y)
    check(y, x, w, b)

    # (d) Pallas path: K-reduction grid axis + f32 accumulator
    #     (budget forced small so the K-split code path is exercised).
    x, w, b = make(128, 8192, 256, *ks[9:12])
    y = embed(x, w, b, allow_fallback=False, vmem_budget_bytes=4 << 20)
    jax.block_until_ready(y)
    check(y, x, w, b)

    print("KERNEL_OK")
</pallas_src>

<mosaic_0001>
module attributes {stable_mosaic.version = 11 : i64} {
  func.func @_embed_kernel(%arg0: i32, %arg1: memref<200x96xf32, #tpu.memory_space<vmem>>, %arg2: memref<96x320xf32, #tpu.memory_space<vmem>>, %arg3: memref<1x320xf32, #tpu.memory_space<vmem>>, %arg4: memref<200x320xf32, #tpu.memory_space<vmem>>) attributes {dimension_semantics = [#tpu.dimension_semantics<parallel>], iteration_bounds = array<i64: 1>, scalar_prefetch = 0 : i64, scratch_operands = 0 : i64, tpu.core_type = #tpu.core_type<tc>, window_params = [{transform_indices = @transform_0, window_bounds = array<i64: 200, 96>}, {pipeline_mode = #tpu.pipeline_mode<synchronous>, transform_indices = @transform_1, window_bounds = array<i64: 96, 320>}, {pipeline_mode = #tpu.pipeline_mode<synchronous>, transform_indices = @transform_2, window_bounds = array<i64: 1, 320>}, {transform_indices = @transform_3, window_bounds = array<i64: 200, 320>}]} {
    %c0 = arith.constant 0 : index
    %c0_0 = arith.constant 0 : index
    %0 = vector.load %arg1[%c0, %c0_0] : memref<200x96xf32, #tpu.memory_space<vmem>>, vector<200x96xf32>
    %1 = arith.truncf %0 : vector<200x96xf32> to vector<200x96xbf16>
    %c0_1 = arith.constant 0 : index
    %c0_2 = arith.constant 0 : index
    %2 = vector.load %arg2[%c0_1, %c0_2] : memref<96x320xf32, #tpu.memory_space<vmem>>, vector<96x320xf32>
    %3 = arith.truncf %2 : vector<96x320xf32> to vector<96x320xbf16>
    %cst = arith.constant dense<0.000000e+00> : vector<200x320xf32>
    %4 = tpu.matmul %1, %3, %cst {dimension_numbers = #tpu.dot_dimension_numbers<[1], [0], [0], [1], [0, 0, 1, 1], [], []>} : vector<200x96xbf16>, vector<96x320xbf16>, vector<200x320xf32> -> vector<200x320xf32>
    %c0_3 = arith.constant 0 : index
    %c0_4 = arith.constant 0 : index
    %5 = vector.load %arg3[%c0_3, %c0_4] : memref<1x320xf32, #tpu.memory_space<vmem>>, vector<1x320xf32>
    %6 = vector.broadcast %5 : vector<1x320xf32> to vector<200x320xf32>
    %7 = arith.addf %4, %6 : vector<200x320xf32>
    %c0_5 = arith.constant 0 : index
    %c0_6 = arith.constant 0 : index
    %8 = vector.load %arg4[%c0_5, %c0_6] : memref<200x320xf32, #tpu.memory_space<vmem>>, vector<200x320xf32>
    tpu.vector_store %arg4[%c0_5, %c0_6], %7 {strides = array<i32>} : memref<200x320xf32, #tpu.memory_space<vmem>>, vector<200x320xf32>,
    return
  }
  func.func @transform_0(%arg0: i32) -> (i32, i32) {
    %c0_i32 = arith.constant 0 : i32
    %c0_i32_0 = arith.constant 0 : i32
    return %arg0, %c0_i32 : i32, i32
  }
  func.func @transform_1(%arg0: i32) -> (i32, i32) {
    %c0_i32 = arith.constant 0 : i32
    %c0_i32_0 = arith.constant 0 : i32
    %c0_i32_1 = arith.constant 0 : i32
    return %c0_i32, %c0_i32_0 : i32, i32
  }
  func.func @transform_2(%arg0: i32) -> (i32, i32) {
    %c0_i32 = arith.constant 0 : i32
    %c0_i32_0 = arith.constant 0 : i32
    %c0_i32_1 = arith.constant 0 : i32
    return %c0_i32, %c0_i32_0 : i32, i32
  }
  func.func @transform_3(%arg0: i32) -> (i32, i32) {
    %c0_i32 = arith.constant 0 : i32
    %c0_i32_0 = arith.constant 0 : i32
    return %arg0, %c0_i32 : i32, i32
  }
}

</mosaic_0001>

<llo_original>
// kernel: tpu_custom_call.1
$region0: #{tpu_custom_call.1}
  #allocation0 [shape = 'u32[]', space=smem, size = 0x4, offset = 0x4, fixed_abs, tag = 'smem constant byte address 0x4 - core index']
  #allocation1 [shape = 'u32[144,128]{1,0:T(1,128)}', space=vmem, size = 0x12000, scoped, tag = 'internal scratch']
  %s0 = inlined_call_operand.vmem [shape: f32[200,96], index: 0, kind: input, shape index: {}]
  %s1 = inlined_call_operand.vmem [shape: f32[96,320], index: 1, kind: input, shape index: {}]
  %s2 = inlined_call_operand.vmem [shape: f32[1,320], index: 2, kind: input, shape index: {}]
  %s3 = inlined_call_operand.hbm [shape: f32[200,320], index: 3, kind: output, shape index: {}]
  %s4 = sld [smem:[#allocation0]]
  $region22: #{tpu_custom_call.1} parent=0
    _
  %s6 = ssub.s32 1, %s4
  %s7 = scalar_select 0, %s6, %s4
  $region1: #{tpu_custom_call.1} parent=0
    #allocation2 [shape = 'u8[307200]{0}', space=vmem, size = 0x4b000, scoped, tag = 'output window, operand 0, single buffered']
    #allocation3 [shape = 's32[1]{0}', space=sflag, size = 0x4, scoped, tag = 'scoped memory for tpu_custom_call.1']
    %8 = vsyncpa [#allocation3], 0
    // Predicated region
    $region2: #{tpu_custom_call.1} parent=1 // pred_check
      _
    $region3: #{tpu_custom_call.1} parent=1 // pred_check_branch
      %10 = sbr.rel (0) target = $region5
    $region4: #{tpu_custom_call.1} parent=1 // pred_region
      _
    $region5: #{tpu_custom_call.1} parent=1 // pred_fallthru
      _
    // Predicated region
    $region6: #{tpu_custom_call.1} parent=1 // pred_check
      _
    $region7: #{tpu_custom_call.1} parent=1 // pred_check_branch
      %12 = sbr.rel (0) target = $region9
    $region8: #{tpu_custom_call.1} parent=1 // pred_region
      _
    $region9: #{tpu_custom_call.1} parent=1 // pred_fallthru
      _
    // Predicated region
    $region10: #{tpu_custom_call.1} parent=1 // pred_check
      _
    $region11: #{tpu_custom_call.1} parent=1 // pred_check_branch
      %14 = sbr.rel (0) target = $region13
    $region12: #{tpu_custom_call.1} parent=1 // pred_region
      _
    $region13: #{tpu_custom_call.1} parent=1 // pred_fallthru
      _
    %v16 = vld [vmem:[%s0] sm:$0xff]
    %v17 = vld [vmem:[%s0 + $0x8] sm:$0xff]
    %v18 = vld [vmem:[%s0 + $0x10] sm:$0xff]
    %v19 = vld [vmem:[%s0 + $0x18] sm:$0xff]
    %v20 = vld [vmem:[%s0 + $0x20] sm:$0xff]
    %v21 = vld [vmem:[%s0 + $0x28] sm:$0xff]
    %v22 = vld [vmem:[%s0 + $0x30] sm:$0xff]
    %v23 = vld [vmem:[%s0 + $0x38] sm:$0xff]
    %v24 = vld [vmem:[%s0 + $0x40] sm:$0xff]
    %v25 = vld [vmem:[%s0 + $0x48] sm:$0xff]
    %v26 = vld [vmem:[%s0 + $0x50] sm:$0xff]
    %v27 = vld [vmem:[%s0 + $0x58] sm:$0xff]
    %v28 = vld [vmem:[%s0 + $0x60] sm:$0xff]
    %v29 = vld [vmem:[%s0 + $0x68] sm:$0xff]
    %v30 = vld [vmem:[%s0 + $0x70] sm:$0xff]
    %v31 = vld [vmem:[%s0 + $0x78] sm:$0xff]
    %v32 = vld [vmem:[%s0 + $0x80] sm:$0xff]
    %v33 = vld [vmem:[%s0 + $0x88] sm:$0xff]
    %v34 = vld [vmem:[%s0 + $0x90] sm:$0xff]
    %v35 = vld [vmem:[%s0 + $0x98] sm:$0xff]
    %v36 = vld [vmem:[%s0 + $0xa0] sm:$0xff]
    %v37 = vld [vmem:[%s0 + $0xa8] sm:$0xff]
    %v38 = vld [vmem:[%s0 + $0xb0] sm:$0xff]
    %v39 = vld [vmem:[%s0 + $0xb8] sm:$0xff]
    %v40 = vld [vmem:[%s0 + $0xc0] sm:$0xff]
    %v41 = vpack.c.bf16 %v17, %v16
    %v42 = vpack.c.bf16 %v19, %v18
    %v43 = vpack.c.bf16 %v21, %v20
    %v44 = vpack.c.bf16 %v23, %v22
    %v45 = vpack.c.bf16 %v25, %v24
    %v46 = vpack.c.bf16 %v27, %v26
    %v47 = vpack.c.bf16 %v29, %v28
    %v48 = vpack.c.bf16 %v31, %v30
    %v49 = vpack.c.bf16 %v33, %v32
    %v50 = vpack.c.bf16 %v35, %v34
    %v51 = vpack.c.bf16 %v37, %v36
    %v52 = vpack.c.bf16 %v39, %v38
    %v53 = vpack.c.bf16 %v40, %v40
    %v54 = vld [vmem:[%s1] sm:$0xff]
    %v55 = vld [vmem:[%s1 + $0x8] sm:$0xff]
    %v56 = vld [vmem:[%s1 + $0x10] sm:$0xff]
    %v57 = vld [vmem:[%s1 + $0x18] sm:$0xff]
    %v58 = vld [vmem:[%s1 + $0x20] sm:$0xff]
    %v59 = vld [vmem:[%s1 + $0x28] sm:$0xff]
    %v60 = vld [vmem:[%s1 + $0x30] sm:$0xff]
    %v61 = vld [vmem:[%s1 + $0x38] sm:$0xff]
    %v62 = vld [vmem:[%s1 + $0x40] sm:$0xff]
    %v63 = vld [vmem:[%s1 + $0x48] sm:$0xff]
    %v64 = vld [vmem:[%s1 + $0x50] sm:$0xff]
    %v65 = vld [vmem:[%s1 + $0x58] sm:$0xff]
    %v66 = vld [vmem:[%s1 + $0x60] sm:$0xff]
    %v67 = vld [vmem:[%s1 + $0x68] sm:$0xff]
    %v68 = vld [vmem:[%s1 + $0x70] sm:$0xff]
    %v69 = vld [vmem:[%s1 + $0x78] sm:$0xff]
    %v70 = vld [vmem:[%s1 + $0x80] sm:$0xff]
    %v71 = vld [vmem:[%s1 + $0x88] sm:$0xff]
    %v72 = vld [vmem:[%s1 + $0x90] sm:$0xff]
    %v73 = vld [vmem:[%s1 + $0x98] sm:$0xff]
    %v74 = vld [vmem:[%s1 + $0xa0] sm:$0xff]
    %v75 = vld [vmem:[%s1 + $0xa8] sm:$0xff]
    %v76 = vld [vmem:[%s1 + $0xb0] sm:$0xff]
    %v77 = vld [vmem:[%s1 + $0xb8] sm:$0xff]
    %v78 = vld [vmem:[%s1 + $0xc0] sm:$0xff]
    %v79 = vld [vmem:[%s1 + $0xc8] sm:$0xff]
    %v80 = vld [vmem:[%s1 + $0xd0] sm:$0xff]
    %v81 = vld [vmem:[%s1 + $0xd8] sm:$0xff]
    %v82 = vld [vmem:[%s1 + $0xe0] sm:$0xff]
    %v83 = vld [vmem:[%s1 + $0xe8] sm:$0xff]
    %v84 = vld [vmem:[%s1 + $0xf0] sm:$0xff]
    %v85 = vld [vmem:[%s1 + $0xf8] sm:$0xff]
    %v86 = vld [vmem:[%s1 + $0x100] sm:$0xff]
    %v87 = vld [vmem:[%s1 + $0x108] sm:$0xff]
    %v88 = vld [vmem:[%s1 + $0x110] sm:$0xff]
    %v89 = vld [vmem:[%s1 + $0x118] sm:$0xff]
    %v90 = vpack.c.bf16 %v57, %v54
    %v91 = vpack.c.bf16 %v58, %v55
    %v92 = vpack.c.bf16 %v59, %v56
    %v93 = vpack.c.bf16 %v63, %v60
    %v94 = vpack.c.bf16 %v64, %v61
    %v95 = vpack.c.bf16 %v65, %v62
    %v96 = vpack.c.bf16 %v69, %v66
    %v97 = vpack.c.bf16 %v70, %v67
    %v98 = vpack.c.bf16 %v71, %v68
    %v99 = vpack.c.bf16 %v75, %v72
    %v100 = vpack.c.bf16 %v76, %v73
    %v101 = vpack.c.bf16 %v77, %v74
    %v102 = vpack.c.bf16 %v81, %v78
    %v103 = vpack.c.bf16 %v82, %v79
    %v104 = vpack.c.bf16 %v83, %v80
    %v105 = vpack.c.bf16 %v87, %v84
    %v106 = vpack.c.bf16 %v88, %v85
    %v107 = vpack.c.bf16 %v89, %v86
    %v108 = vld [vmem:[%s2] sm:$0x7]
    %v110 = vlaneseq
    %v111 = vshrl.u32 %v110, 7
    %v112 = vsub.s32 0, %v111
    %v113 = vrot.slane %v108, %v112
    %v114 = vlaneseq
    %v115 = vshrl.u32 %v114, 7
    %v116 = vsub.s32 1, %v115
    %v117 = vrot.slane %v108, %v116
    %v118 = vlaneseq
    %v119 = vshrl.u32 %v118, 7
    %v120 = vsub.s32 2, %v119
    %v121 = vrot.slane %v108, %v120
    %vm125 = vcmask 785408
    %v127 = vsel %vm125, %v41, 0
    %v130 = vsel %vm125, %v42, 0
    %v133 = vsel %vm125, %v43, 0
    %v136 = vsel %vm125, %v44, 0
    %v139 = vsel %vm125, %v45, 0
    %v142 = vsel %vm125, %v46, 0
    %v145 = vsel %vm125, %v47, 0
    %v148 = vsel %vm125, %v48, 0
    %v151 = vsel %vm125, %v49, 0
    %v154 = vsel %vm125, %v50, 0
    %v157 = vsel %vm125, %v51, 0
    %v160 = vsel %vm125, %v52, 0
    %v163 = vsel %vm125, %v53, 0
    %165 = vmatprep.subr.bf16.mxu0 0
    %166 = vmatpush1.bf16.msra.mxu0 0
    %167 = vmatprep.subr.bf16.mxu0 0
    %168 = vmatpush1.bf16.msra.mxu0 0
    %169 = vmatprep.subr.bf16.mxu0 %v106
    %170 = vmatpush1.bf16.msra.mxu0 %v105
    %171 = vmatprep.subr.bf16.mxu0 %v103
    %172 = vmatpush1.bf16.msra.mxu0 %v102
    %173 = vmatprep.subr.bf16.mxu0 %v100
    %174 = vmatpush1.bf16.msra.mxu0 %v99
    %175 = vmatprep.subr.bf16.mxu0 %v97
    %176 = vmatpush1.bf16.msra.mxu0 %v96
    %177 = vmatprep.subr.bf16.mxu0 %v94
    %178 = vmatpush1.bf16.msra.mxu0 %v93
    %179 = vmatprep.subr.bf16.mxu0 %v91
    %180 = vmatpush1.bf16.msra.mxu0 %v90
    %181 = vmatprep.subr.bf16.mxu0 0
    %182 = vmatpush2.bf16.msra.mxu0 0
    %183 = vmatprep.subr.bf16.mxu0 0
    %184 = vmatpush2.bf16.msra.mxu0 0
    %185 = vmatprep.subr.bf16.mxu0 0
    %186 = vmatpush2.bf16.msra.mxu0 0
    %187 = vmatprep.subr.bf16.mxu0 0
    %188 = vmatpush2.bf16.msra.mxu0 0
    %189 = vmatprep.subr.bf16.mxu0 0
    %190 = vmatpush2.bf16.msra.mxu0 0
    %191 = vmatprep.subr.bf16.mxu0 0
    %192 = vmatpush2.bf16.msra.mxu0 0
    %193 = vmatprep.subr.bf16.mxu0 0
    %194 = vmatpush2.bf16.msra.mxu0 0
    %195 = vmatprep.subr.bf16.mxu0 0
    %196 = vmatpush2.bf16.msra.mxu0 0
    %197 = vmatprep.mubr.bf16.mxu0 0
    %198 = vmatmul.mubr.bf16.gmra.mxu0 %v127
    %v199 = vpop.f32.mrf.mxu0
    %v200 = vadd.f32 %v113, %v199
    %v201 = vpop.f32.mrf.mxu0
    %v202 = vadd.f32 %v117, %v201
    %v203 = vpop.f32.mrf.mxu0
    %v204 = vadd.f32 %v113, %v203
    %v205 = vpop.f32.mrf.mxu0
    %v206 = vadd.f32 %v117, %v205
    %207 = vmatprep.mubr.bf16.mxu0 0
    %208 = vmatmul.mubr.bf16.gmra.mxu0 %v130
    %v209 = vpop.f32.mrf.mxu0
    %v210 = vadd.f32 %v113, %v209
    %v211 = vpop.f32.mrf.mxu0
    %v212 = vadd.f32 %v117, %v211
    %v213 = vpop.f32.mrf.mxu0
    %v214 = vadd.f32 %v113, %v213
    %v215 = vpop.f32.mrf.mxu0
    %v216 = vadd.f32 %v117, %v215
    %217 = vmatprep.mubr.bf16.mxu0 0
    %218 = vmatmul.mubr.bf16.gmra.mxu0 %v133
    %v219 = vpop.f32.mrf.mxu0
    %v220 = vadd.f32 %v113, %v219
    %v221 = vpop.f32.mrf.mxu0
    %v222 = vadd.f32 %v117, %v221
    %v223 = vpop.f32.mrf.mxu0
    %v224 = vadd.f32 %v113, %v223
    %v225 = vpop.f32.mrf.mxu0
    %v226 = vadd.f32 %v117, %v225
    %227 = vmatprep.mubr.bf16.mxu0 0
    %228 = vmatmul.mubr.bf16.gmra.mxu0 %v136
    %v229 = vpop.f32.mrf.mxu0
    %v230 = vadd.f32 %v113, %v229
    %v231 = vpop.f32.mrf.mxu0
    %v232 = vadd.f32 %v117, %v231
    %v233 = vpop.f32.mrf.mxu0
    %v234 = vadd.f32 %v113, %v233
    %v235 = vpop.f32.mrf.mxu0
    %v236 = vadd.f32 %v117, %v235
    %237 = vmatprep.mubr.bf16.mxu0 0
    %238 = vmatmul.mubr.bf16.gmra.mxu0 %v139
    %v239 = vpop.f32.mrf.mxu0
    %v240 = vadd.f32 %v113, %v239
    %v241 = vpop.f32.mrf.mxu0
    %v242 = vadd.f32 %v117, %v241
    %v243 = vpop.f32.mrf.mxu0
    %v244 = vadd.f32 %v113, %v243
    %v245 = vpop.f32.mrf.mxu0
    %v246 = vadd.f32 %v117, %v245
    %247 = vmatprep.mubr.bf16.mxu0 0
    %248 = vmatmul.mubr.bf16.gmra.mxu0 %v142
    %v249 = vpop.f32.mrf.mxu0
    %v250 = vadd.f32 %v113, %v249
    %v251 = vpop.f32.mrf.mxu0
    %v252 = vadd.f32 %v117, %v251
    %v253 = vpop.f32.mrf.mxu0
    %v254 = vadd.f32 %v113, %v253
    %v255 = vpop.f32.mrf.mxu0
    %v256 = vadd.f32 %v117, %v255
    %257 = vmatprep.mubr.bf16.mxu0 0
    %258 = vmatmul.mubr.bf16.gmra.mxu0 %v145
    %v259 = vpop.f32.mrf.mxu0
    %v260 = vadd.f32 %v113, %v259
    %v261 = vpop.f32.mrf.mxu0
    %v262 = vadd.f32 %v117, %v261
    %v263 = vpop.f32.mrf.mxu0
    %v264 = vadd.f32 %v113, %v263
    %v265 = vpop.f32.mrf.mxu0
    %v266 = vadd.f32 %v117, %v265
    %267 = vmatprep.mubr.bf16.mxu0 0
    %268 = vmatmul.mubr.bf16.gmra.mxu0 %v148
    %v269 = vpop.f32.mrf.mxu0
    %v270 = vadd.f32 %v113, %v269
    %v271 = vpop.f32.mrf.mxu0
    %v272 = vadd.f32 %v117, %v271
    %v273 = vpop.f32.mrf.mxu0
    %v274 = vadd.f32 %v113, %v273
    %v275 = vpop.f32.mrf.mxu0
    %v276 = vadd.f32 %v117, %v275
    %277 = vmatprep.mubr.bf16.mxu0 0
    %278 = vmatmul.mubr.bf16.gmra.mxu0 %v151
    %v279 = vpop.f32.mrf.mxu0
    %v280 = vadd.f32 %v113, %v279
    %v281 = vpop.f32.mrf.mxu0
    %v282 = vadd.f32 %v117, %v281
    %v283 = vpop.f32.mrf.mxu0
    %v284 = vadd.f32 %v113, %v283
    %v285 = vpop.f32.mrf.mxu0
    %v286 = vadd.f32 %v117, %v285
    %287 = vmatprep.mubr.bf16.mxu0 0
    %288 = vmatmul.mubr.bf16.gmra.mxu0 %v154
    %v289 = vpop.f32.mrf.mxu0
    %v290 = vadd.f32 %v113, %v289
    %v291 = vpop.f32.mrf.mxu0
    %v292 = vadd.f32 %v117, %v291
    %v293 = vpop.f32.mrf.mxu0
    %v294 = vadd.f32 %v113, %v293
    %v295 = vpop.f32.mrf.mxu0
    %v296 = vadd.f32 %v117, %v295
    %297 = vmatprep.mubr.bf16.mxu0 0
    %298 = vmatmul.mubr.bf16.gmra.mxu0 %v157
    %v299 = vpop.f32.mrf.mxu0
    %v300 = vadd.f32 %v113, %v299
    %v301 = vpop.f32.mrf.mxu0
    %v302 = vadd.f32 %v117, %v301
    %v303 = vpop.f32.mrf.mxu0
    %v304 = vadd.f32 %v113, %v303
    %v305 = vpop.f32.mrf.mxu0
    %v306 = vadd.f32 %v117, %v305
    %307 = vmatprep.mubr.bf16.mxu0 0
    %308 = vmatmul.mubr.bf16.gmra.mxu0 %v160
    %v309 = vpop.f32.mrf.mxu0
    %v310 = vadd.f32 %v113, %v309
    %v311 = vpop.f32.mrf.mxu0
    %v312 = vadd.f32 %v117, %v311
    %v313 = vpop.f32.mrf.mxu0
    %v314 = vadd.f32 %v113, %v313
    %v315 = vpop.f32.mrf.mxu0
    %v316 = vadd.f32 %v117, %v315
    %317 = vmatprep.mubr.bf16.mxu0 0
    %318 = vmatmul.mubr.bf16.gmra.mxu0 %v163
    %v319 = vpop.f32.mrf.mxu0
    %v320 = vadd.f32 %v113, %v319
    %v321 = vpop.f32.mrf.mxu0
    %v322 = vadd.f32 %v117, %v321
    %v323 = vpop.f32.mrf.mxu0
    %v324 = vpop.f32.mrf.mxu0
    %325 = vdwg.mxu0
    %326 = vmatprep.subr.bf16.mxu0 0
    %327 = vmatpush1.bf16.msra.mxu0 0
    %328 = vmatprep.subr.bf16.mxu0 0
    %329 = vmatpush1.bf16.msra.mxu0 0
    %330 = vmatprep.subr.bf16.mxu0 0
    %331 = vmatpush1.bf16.msra.mxu0 %v107
    %332 = vmatprep.subr.bf16.mxu0 0
    %333 = vmatpush1.bf16.msra.mxu0 %v104
    %334 = vmatprep.subr.bf16.mxu0 0
    %335 = vmatpush1.bf16.msra.mxu0 %v101
    %336 = vmatprep.subr.bf16.mxu0 0
    %337 = vmatpush1.bf16.msra.mxu0 %v98
    %338 = vmatprep.subr.bf16.mxu0 0
    %339 = vmatpush1.bf16.msra.mxu0 %v95
    %340 = vmatprep.subr.bf16.mxu0 0
    %341 = vmatpush1.bf16.msra.mxu0 %v92
    %342 = vmatprep.subr.bf16.mxu0 0
    %343 = vmatpush2.bf16.msra.mxu0 0
    %344 = vmatprep.subr.bf16.mxu0 0
    %345 = vmatpush2.bf16.msra.mxu0 0
    %346 = vmatprep.subr.bf16.mxu0 0
    %347 = vmatpush2.bf16.msra.mxu0 0
    %348 = vmatprep.subr.bf16.mxu0 0
    %349 = vmatpush2.bf16.msra.mxu0 0
    %350 = vmatprep.subr.bf16.mxu0 0
    %351 = vmatpush2.bf16.msra.mxu0 0
    %352 = vmatprep.subr.bf16.mxu0 0
    %353 = vmatpush2.bf16.msra.mxu0 0
    %354 = vmatprep.subr.bf16.mxu0 0
    %355 = vmatpush2.bf16.msra.mxu0 0
    %356 = vmatprep.subr.bf16.mxu0 0
    %357 = vmatpush2.bf16.msra.mxu0 0
    %358 = vmatprep.mubr.bf16.mxu0 0
    %359 = vmatmul.mubr.bf16.gmra.mxu0 %v127
    %v360 = vpop.f32.mrf.mxu0
    %v361 = vadd.f32 %v121, %v360
    %v362 = vpop.f32.mrf.mxu0
    %v363 = vpop.f32.mrf.mxu0
    %v364 = vadd.f32 %v121, %v363
    %v365 = vpop.f32.mrf.mxu0
    %366 = vmatprep.mubr.bf16.mxu0 0
    %367 = vmatmul.mubr.bf16.gmra.mxu0 %v130
    %v368 = vpop.f32.mrf.mxu0
    %v369 = vadd.f32 %v121, %v368
    %v370 = vpop.f32.mrf.mxu0
    %v371 = vpop.f32.mrf.mxu0
    %v372 = vadd.f32 %v121, %v371
    %v373 = vpop.f32.mrf.mxu0
    %374 = vmatprep.mubr.bf16.mxu0 0
    %375 = vmatmul.mubr.bf16.gmra.mxu0 %v133
    %v376 = vpop.f32.mrf.mxu0
    %v377 = vadd.f32 %v121, %v376
    %v378 = vpop.f32.mrf.mxu0
    %v379 = vpop.f32.mrf.mxu0
    %v380 = vadd.f32 %v121, %v379
    %v381 = vpop.f32.mrf.mxu0
    %382 = vmatprep.mubr.bf16.mxu0 0
    %383 = vmatmul.mubr.bf16.gmra.mxu0 %v136
    %v384 = vpop.f32.mrf.mxu0
    %v385 = vadd.f32 %v121, %v384
    %v386 = vpop.f32.mrf.mxu0
    %v387 = vpop.f32.mrf.mxu0
    %v388 = vadd.f32 %v121, %v387
    %v389 = vpop.f32.mrf.mxu0
    %390 = vmatprep.mubr.bf16.mxu0 0
    %391 = vmatmul.mubr.bf16.gmra.mxu0 %v139
    %v392 = vpop.f32.mrf.mxu0
    %v393 = vadd.f32 %v121, %v392
    %v394 = vpop.f32.mrf.mxu0
    %v395 = vpop.f32.mrf.mxu0
    %v396 = vadd.f32 %v121, %v395
    %v397 = vpop.f32.mrf.mxu0
    %398 = vmatprep.mubr.bf16.mxu0 0
    %399 = vmatmul.mubr.bf16.gmra.mxu0 %v142
    %v400 = vpop.f32.mrf.mxu0
    %v401 = vadd.f32 %v121, %v400
    %v402 = vpop.f32.mrf.mxu0
    %v403 = vpop.f32.mrf.mxu0
    %v404 = vadd.f32 %v121, %v403
    %v405 = vpop.f32.mrf.mxu0
    %406 = vmatprep.mubr.bf16.mxu0 0
    %407 = vmatmul.mubr.bf16.gmra.mxu0 %v145
    %v408 = vpop.f32.mrf.mxu0
    %v409 = vadd.f32 %v121, %v408
    %v410 = vpop.f32.mrf.mxu0
    %v411 = vpop.f32.mrf.mxu0
    %v412 = vadd.f32 %v121, %v411
    %v413 = vpop.f32.mrf.mxu0
    %414 = vmatprep.mubr.bf16.mxu0 0
    %415 = vmatmul.mubr.bf16.gmra.mxu0 %v148
    %v416 = vpop.f32.mrf.mxu0
    %v417 = vadd.f32 %v121, %v416
    %v418 = vpop.f32.mrf.mxu0
    %v419 = vpop.f32.mrf.mxu0
    %v420 = vadd.f32 %v121, %v419
    %v421 = vpop.f32.mrf.mxu0
    %422 = vmatprep.mubr.bf16.mxu0 0
    %423 = vmatmul.mubr.bf16.gmra.mxu0 %v151
    %v424 = vpop.f32.mrf.mxu0
    %v425 = vadd.f32 %v121, %v424
    %v426 = vpop.f32.mrf.mxu0
    %v427 = vpop.f32.mrf.mxu0
    %v428 = vadd.f32 %v121, %v427
    %v429 = vpop.f32.mrf.mxu0
    %430 = vmatprep.mubr.bf16.mxu0 0
    %431 = vmatmul.mubr.bf16.gmra.mxu0 %v154
    %v432 = vpop.f32.mrf.mxu0
    %v433 = vadd.f32 %v121, %v432
    %v434 = vpop.f32.mrf.mxu0
    %v435 = vpop.f32.mrf.mxu0
    %v436 = vadd.f32 %v121, %v435
    %v437 = vpop.f32.mrf.mxu0
    %438 = vmatprep.mubr.bf16.mxu0 0
    %439 = vmatmul.mubr.bf16.gmra.mxu0 %v157
    %v440 = vpop.f32.mrf.mxu0
    %v441 = vadd.f32 %v121, %v440
    %v442 = vpop.f32.mrf.mxu0
    %v443 = vpop.f32.mrf.mxu0
    %v444 = vadd.f32 %v121, %v443
    %v445 = vpop.f32.mrf.mxu0
    %446 = vmatprep.mubr.bf16.mxu0 0
    %447 = vmatmul.mubr.bf16.gmra.mxu0 %v160
    %v448 = vpop.f32.mrf.mxu0
    %v449 = vadd.f32 %v121, %v448
    %v450 = vpop.f32.mrf.mxu0
    %v451 = vpop.f32.mrf.mxu0
    %v452 = vadd.f32 %v121, %v451
    %v453 = vpop.f32.mrf.mxu0
    %454 = vmatprep.mubr.bf16.mxu0 0
    %455 = vmatmul.mubr.bf16.gmra.mxu0 %v163
    %v456 = vpop.f32.mrf.mxu0
    %v457 = vadd.f32 %v121, %v456
    %v458 = vpop.f32.mrf.mxu0
    %v459 = vpop.f32.mrf.mxu0
    %v460 = vpop.f32.mrf.mxu0
    %461 = vdwg.mxu0
    %462 = vst [vmem:[#allocation2] sm:$0xff] %v200
    %463 = vst [vmem:[#allocation2 + $0x8] sm:$0xff] %v202
    %vm464 = vcmask 523264
    %465 = vst.msk [vmem:[#allocation2 + $0x10] sm:$0xff] %vm464, %v361
    %466 = vst [vmem:[#allocation2 + $0x18] sm:$0xff] %v204
    %467 = vst [vmem:[#allocation2 + $0x20] sm:$0xff] %v206
    %468 = vst.msk [vmem:[#allocation2 + $0x28] sm:$0xff] %vm464, %v364
    %469 = vst [vmem:[#allocation2 + $0x30] sm:$0xff] %v210
    %470 = vst [vmem:[#allocation2 + $0x38] sm:$0xff] %v212
    %471 = vst.msk [vmem:[#allocation2 + $0x40] sm:$0xff] %vm464, %v369
    %472 = vst [vmem:[#allocation2 + $0x48] sm:$0xff] %v214
    %473 = vst [vmem:[#allocation2 + $0x50] sm:$0xff] %v216
    %474 = vst.msk [vmem:[#allocation2 + $0x58] sm:$0xff] %vm464, %v372
    %475 = vst [vmem:[#allocation2 + $0x60] sm:$0xff] %v220
    %476 = vst [vmem:[#allocation2 + $0x68] sm:$0xff] %v222
    %477 = vst.msk [vmem:[#allocation2 + $0x70] sm:$0xff] %vm464, %v377
    %478 = vst [vmem:[#allocation2 + $0x78] sm:$0xff] %v224
    %479 = vst [vmem:[#allocation2 + $0x80] sm:$0xff] %v226
    %480 = vst.msk [vmem:[#allocation2 + $0x88] sm:$0xff] %vm464, %v380
    %481 = vst [vmem:[#allocation2 + $0x90] sm:$0xff] %v230
    %482 = vst [vmem:[#allocation2 + $0x98] sm:$0xff] %v232
    %483 = vst.msk [vmem:[#allocation2 + $0xa0] sm:$0xff] %vm464, %v385
    %484 = vst [vmem:[#allocation2 + $0xa8] sm:$0xff] %v234
    %485 = vst [vmem:[#allocation2 + $0xb0] sm:$0xff] %v236
    %486 = vst.msk [vmem:[#allocation2 + $0xb8] sm:$0xff] %vm464, %v388
    %487 = vst [vmem:[#allocation2 + $0xc0] sm:$0xff] %v240
    %488 = vst [vmem:[#allocation2 + $0xc8] sm:$0xff] %v242
    %489 = vst.msk [vmem:[#allocation2 + $0xd0] sm:$0xff] %vm464, %v393
    %490 = vst [vmem:[#allocation2 + $0xd8] sm:$0xff] %v244
    %491 = vst [vmem:[#allocation2 + $0xe0] sm:$0xff] %v246
    %492 = vst.msk [vmem:[#allocation2 + $0xe8] sm:$0xff] %vm464, %v396
    %493 = vst [vmem:[#allocation2 + $0xf0] sm:$0xff] %v250
    %494 = vst [vmem:[#allocation2 + $0xf8] sm:$0xff] %v252
    %495 = vst.msk [vmem:[#allocation2 + $0x100] sm:$0xff] %vm464, %v401
    %496 = vst [vmem:[#allocation2 + $0x108] sm:$0xff] %v254
    %497 = vst [vmem:[#allocation2 + $0x110] sm:$0xff] %v256
    %498 = vst.msk [vmem:[#allocation2 + $0x118] sm:$0xff] %vm464, %v404
    %499 = vst [vmem:[#allocation2 + $0x120] sm:$0xff] %v260
    %500 = vst [vmem:[#allocation2 + $0x128] sm:$0xff] %v262
    %501 = vst.msk [vmem:[#allocation2 + $0x130] sm:$0xff] %vm464, %v409
    %502 = vst [vmem:[#allocation2 + $0x138] sm:$0xff] %v264
    %503 = vst [vmem:[#allocation2 + $0x140] sm:$0xff] %v266
    %504 = vst.msk [vmem:[#allocation2 + $0x148] sm:$0xff] %vm464, %v412
    %505 = vst [vmem:[#allocation2 + $0x150] sm:$0xff] %v270
    %506 = vst [vmem:[#allocation2 + $0x158] sm:$0xff] %v272
    %507 = vst.msk [vmem:[#allocation2 + $0x160] sm:$0xff] %vm464, %v417
    %508 = vst [vmem:[#allocation2 + $0x168] sm:$0xff] %v274
    %509 = vst [vmem:[#allocation2 + $0x170] sm:$0xff] %v276
    %510 = vst.msk [vmem:[#allocation2 + $0x178] sm:$0xff] %vm464, %v420
    %511 = vst [vmem:[#allocation2 + $0x180] sm:$0xff] %v280
    %512 = vst [vmem:[#allocation2 + $0x188] sm:$0xff] %v282
    %513 = vst.msk [vmem:[#allocation2 + $0x190] sm:$0xff] %vm464, %v425
    %514 = vst [vmem:[#allocation2 + $0x198] sm:$0xff] %v284
    %515 = vst [vmem:[#allocation2 + $0x1a0] sm:$0xff] %v286
    %516 = vst.msk [vmem:[#allocation2 + $0x1a8] sm:$0xff] %vm464, %v428
    %517 = vst [vmem:[#allocation2 + $0x1b0] sm:$0xff] %v290
    %518 = vst [vmem:[#allocation2 + $0x1b8] sm:$0xff] %v292
    %519 = vst.msk [vmem:[#allocation2 + $0x1c0] sm:$0xff] %vm464, %v433
    %520 = vst [vmem:[#allocation2 + $0x1c8] sm:$0xff] %v294
    %521 = vst [vmem:[#allocation2 + $0x1d0] sm:$0xff] %v296
    %522 = vst.msk [vmem:[#allocation2 + $0x1d8] sm:$0xff] %vm464, %v436
    %523 = vst [vmem:[#allocation2 + $0x1e0] sm:$0xff] %v300
    %524 = vst [vmem:[#allocation2 + $0x1e8] sm:$0xff] %v302
    %525 = vst.msk [vmem:[#allocation2 + $0x1f0] sm:$0xff] %vm464, %v441
    %526 = vst [vmem:[#allocation2 + $0x1f8] sm:$0xff] %v304
    %527 = vst [vmem:[#allocation2 + $0x200] sm:$0xff] %v306
    %528 = vst.msk [vmem:[#allocation2 + $0x208] sm:$0xff] %vm464, %v444
    %529 = vst [vmem:[#allocation2 + $0x210] sm:$0xff] %v310
    %530 = vst [vmem:[#allocation2 + $0x218] sm:$0xff] %v312
    %531 = vst.msk [vmem:[#allocation2 + $0x220] sm:$0xff] %vm464, %v449
    %532 = vst [vmem:[#allocation2 + $0x228] sm:$0xff] %v314
    %533 = vst [vmem:[#allocation2 + $0x230] sm:$0xff] %v316
    %534 = vst.msk [vmem:[#allocation2 + $0x238] sm:$0xff] %vm464, %v452
    %535 = vst [vmem:[#allocation2 + $0x240] sm:$0xff] %v320
    %536 = vst [vmem:[#allocation2 + $0x248] sm:$0xff] %v322
    %537 = vst.msk [vmem:[#allocation2 + $0x250] sm:$0xff] %vm464, %v457
    // Predicated region
    $region14: #{tpu_custom_call.1} parent=1 // pred_check
      _
    $region15: #{tpu_custom_call.1} parent=1 // pred_check_branch
      %539 = sbr.rel (0) target = $region17
    $region16: #{tpu_custom_call.1} parent=1 // pred_region
      %s541 = ssub.s32 9600, 9600
      %542 = vsyncadd [#allocation3], %s541
      %s543 = sshll.u32 [#allocation2], 4
      %s544 = int_to_ptr.vmem [resolvable:$true] %s543
      %549 = dma.vmem_to_hbm [thread:$0]  %s544, 9600, %s3, [#allocation3], 384, 384, 24
    $region17: #{tpu_custom_call.1} parent=1 // pred_fallthru
      _
    // Predicated region
    $region18: #{tpu_custom_call.1} parent=1 // pred_check
      _
    $region19: #{tpu_custom_call.1} parent=1 // pred_check_branch
      %551 = sbr.rel (0) target = $region21
    $region20: #{tpu_custom_call.1} parent=1 // pred_region
      %552 = dma.done [#allocation3], 9600
    $region21: #{tpu_custom_call.1} parent=1 // pred_fallthru
      _
    %553 = vsyncpa [#allocation3], 1

</llo_original>
